<compile_context>
chip_gen: v7x
topology: tpu7x:2x2x1
jax: 0.10.0
libtpu: 0.0.40
codegen_flags: <defaults>
</compile_context>

<pallas_src>
import jax
import jax.numpy as jnp
from jax.experimental import pallas as pl
from jax.experimental.pallas import tpu as pltpu

_LANE = 128
_SUBLANE = 8


def _round_up(x, m):
    return ((x + m - 1) // m) * m


def _cdiv(a, b):
    return (a + b - 1) // b


def _sublane_align(dtype):
    # Packed sub-32-bit dtypes want proportionally more sublanes per tile.
    return _SUBLANE * max(1, 4 // dtype.itemsize)


def _choose_fold(batch, seq_len, max_width):
    """Pick k | batch for the free (B,T)->(B//k, k*T) reshape: fill 128 lanes,
    then prefer the narrowest such width (keeps more rows for the grid)."""
    best_k, best_score = 1, None
    for k in range(1, batch + 1):
        if batch % k:
            continue
        w = k * seq_len
        if w > max_width and k > 1:
            break
        util = w / _round_up(w, _LANE)
        score = (util, -w)
        if best_score is None or score > best_score:
            best_k, best_score = k, score
    return best_k


def _make_kernel(valid_rows, block_rows, seq_len, true_width):
    """Static closure ints: valid_rows = folded rows, block_rows = tile rows,
    seq_len = original T, true_width = unpadded folded width."""

    def kernel(inp_ref, vsrc_ref, rew_ref, out_ref):
        # Upcast in-kernel only (inputs stay native in HBM/VMEM).
        inp = inp_ref[...].astype(jnp.float32)      # log-prob of sampled word
        rew = rew_ref[...].astype(jnp.float32)      # per-token reward
        tb, w = inp.shape

        # Validity source: seq word-ids or a caller-supplied int8/uint8 mask.
        valid = (vsrc_ref[...].astype(jnp.float32) > 0.0).astype(jnp.float32)

        # Shift right by one along the folded sequence axis.  Width is always a
        # multiple of 128 (wrapper guarantees it), so this is the aligned XLU
        # roll fast path.  Every position receiving a wrapped / cross-sequence
        # value has col % seq_len == 0 and is overwritten with 1 below.
        shifted = pltpu.roll(valid, shift=1, axis=1)

        col = jax.lax.broadcasted_iota(jnp.int32, (tb, w), 1)
        row = block_rows * pl.program_id(0) + jax.lax.broadcasted_iota(
            jnp.int32, (tb, w), 0)

        mask = jnp.where((col % seq_len) == 0, jnp.float32(1.0), shifted)

        # Zero out rows past the true (folded) batch and any zero-padded lane
        # tail; the where also keeps garbage/NaN from partial blocks out.
        ok = row < valid_rows
        if true_width != w:
            ok = ok & (col < true_width)
        mask = jnp.where(ok, mask, jnp.float32(0.0))
        contrib = jnp.where(ok, -inp * rew * mask, jnp.float32(0.0))

        num = jnp.sum(contrib)
        den = jnp.sum(mask)

        # Lane-dense partial tile: [0,0] = num, [0,1] (and everything else) = den.
        lane = jax.lax.broadcasted_iota(jnp.int32, (_SUBLANE, _LANE), 1)
        out_ref[0] = jnp.where(lane == 0, num, den)

    return kernel


def reward_criterion(inp, seq, reward, *, valid=None, tile_rows=None,
                     vmem_budget_bytes=8 * 1024 * 1024, max_fold_width=2048):
    """inp: (B, T) float log-probs; seq: (B, T) int word ids; reward: (B, T) float.

    If `valid` is given (int8/uint8/bool (B, T), nonzero where seq > 0), it is used
    instead of `seq` — a 1-byte stream cuts HBM traffic ~25-37% on this
    bandwidth-bound kernel.  No wrapper-side conversion pass is performed.
    """
    inp = jnp.asarray(inp)
    reward = jnp.asarray(reward)
    if valid is not None:
        vsrc = jnp.asarray(valid)
        if vsrc.dtype == jnp.bool_:
            vsrc = vsrc.astype(jnp.uint8)
    else:
        vsrc = jnp.asarray(seq)

    B, T = inp.shape
    assert reward.shape == (B, T) and vsrc.shape == (B, T)

    # ---- lane densification: free row-major reshape (B,T) -> (B//k, k*T) ----
    k = _choose_fold(B, T, max_fold_width)
    rows, width = B // k, k * T
    inp_f = inp.reshape(rows, width)
    rew_f = reward.reshape(rows, width)
    vsrc_f = vsrc.reshape(rows, width)

    # ---- only if the free reshape can't reach a 128 multiple: zero-pad tail ----
    wpad = _round_up(width, _LANE)
    if wpad != width:
        padcfg = ((0, 0), (0, wpad - width))
        inp_f = jnp.pad(inp_f, padcfg)
        rew_f = jnp.pad(rew_f, padcfg)
        vsrc_f = jnp.pad(vsrc_f, padcfg)

    # ---- batch-tile rows from a VMEM budget ----
    # 2x double-buffered native inputs + ~5 block-sized f32 temporaries per row.
    sub_align = max(_sublane_align(a.dtype) for a in (inp_f, rew_f, vsrc_f))
    native_bytes = (inp_f.dtype.itemsize + rew_f.dtype.itemsize
                    + vsrc_f.dtype.itemsize)
    row_bytes = wpad * (2 * native_bytes + 5 * 4)
    if tile_rows is None:
        tile_rows = max(sub_align,
                        (vmem_budget_bytes // row_bytes) // sub_align * sub_align)

    # v7x megacore: keep >= 2 (ideally 4) grid blocks when rows permit, so the
    # "parallel" axis actually shards across both TensorCores.  Costs ~0.35us per
    # extra grid step on single-TC chips — negligible.
    if rows >= 4 * sub_align:
        tile_rows = min(tile_rows, _round_up(_cdiv(rows, 4), sub_align))
    elif rows >= 2 * sub_align:
        tile_rows = min(tile_rows, _round_up(_cdiv(rows, 2), sub_align))

    if rows <= tile_rows:
        tb = rows                               # single block == full array extent
    else:
        tb = _round_up(tile_rows, sub_align)    # tiling-aligned sublane tile

    grid = (_cdiv(rows, tb),)
    g = grid[0]

    cost = pl.CostEstimate(
        flops=5 * B * T,
        transcendentals=0,
        bytes_accessed=(inp_f.size * inp_f.dtype.itemsize
                        + rew_f.size * rew_f.dtype.itemsize
                        + vsrc_f.size * vsrc_f.dtype.itemsize
                        + g * _SUBLANE * _LANE * 4),
    )

    partials = pl.pallas_call(
        _make_kernel(rows, tb, T, width),
        out_shape=jax.ShapeDtypeStruct((g, _SUBLANE, _LANE), jnp.float32),
        grid=grid,
        in_specs=[
            pl.BlockSpec((tb, wpad), lambda i: (i, 0)),   # input (log-probs)
            pl.BlockSpec((tb, wpad), lambda i: (i, 0)),   # seq / validity source
            pl.BlockSpec((tb, wpad), lambda i: (i, 0)),   # reward
        ],
        out_specs=pl.BlockSpec((1, _SUBLANE, _LANE), lambda i: (i, 0, 0)),
        compiler_params=pltpu.CompilerParams(
            dimension_semantics=("parallel",),            # megacore shards on v7x
            vmem_limit_bytes=32 * 1024 * 1024,
        ),
        cost_estimate=cost,
    )(inp_f, vsrc_f, rew_f)

    # Tiny final reduction + divide in plain JAX (g blocks x 2 scalars).
    num = jnp.sum(partials[:, 0, 0])
    den = jnp.sum(partials[:, 0, 1])
    return num / den


def _reference(inp, seq, reward):
    # Pure-JAX reference mirroring the PyTorch forward.
    inp = jnp.asarray(inp, jnp.float32).reshape(-1)
    reward = jnp.asarray(reward, jnp.float32).reshape(-1)
    m = (jnp.asarray(seq) > 0).astype(jnp.float32)
    mask = jnp.concatenate(
        [jnp.ones((m.shape[0], 1), jnp.float32), m[:, :-1]], axis=1).reshape(-1)
    out = -inp * reward * mask
    return jnp.sum(out) / jnp.sum(mask)


if __name__ == "__main__":
    key = jax.random.PRNGKey(0)
    ks = jax.random.split(key, 9)

    # 1) Small shape (batch=2, seq=8): exercises fold + lane-pad path, one block.
    B, T = 2, 8
    inp = -jnp.abs(jax.random.normal(ks[0], (B, T), jnp.float32)) - 0.1
    seq = jax.random.randint(ks[1], (B, T), 0, 5, jnp.int32)
    rew = jax.random.normal(ks[2], (B, T), jnp.float32)
    out = jax.block_until_ready(reward_criterion(inp, seq, rew))
    ref = _reference(inp, seq, rew)
    assert jnp.allclose(out, ref, rtol=1e-4, atol=1e-5), (out, ref)

    # 2) Gridded path: free lane-dense fold (160,16)->(20,128), 3 blocks,
    #    partial last batch tile.
    B2, T2 = 160, 16
    inp2 = -jnp.abs(jax.random.normal(ks[3], (B2, T2), jnp.float32)) - 0.1
    seq2 = jax.random.randint(ks[4], (B2, T2), 0, 5, jnp.int32)
    rew2 = jax.random.normal(ks[5], (B2, T2), jnp.float32)
    out2 = jax.block_until_ready(reward_criterion(inp2, seq2, rew2, tile_rows=8))
    ref2 = _reference(inp2, seq2, rew2)
    assert jnp.allclose(out2, ref2, rtol=1e-4, atol=1e-5), (out2, ref2)

    # 3) Caller-supplied 1-byte validity mask (drops the int32 seq stream).
    B3, T3 = 64, 16
    inp3 = -jnp.abs(jax.random.normal(ks[6], (B3, T3), jnp.float32)) - 0.1
    seq3 = jax.random.randint(ks[7], (B3, T3), 0, 5, jnp.int32)
    rew3 = jax.random.normal(ks[8], (B3, T3), jnp.float32)
    valid3 = (seq3 > 0).astype(jnp.int8)
    out3 = jax.block_until_ready(reward_criterion(inp3, None, rew3, valid=valid3))
    ref3 = _reference(inp3, seq3, rew3)
    assert jnp.allclose(out3, ref3, rtol=1e-4, atol=1e-5), (out3, ref3)

    print("KERNEL_OK")
</pallas_src>

<mosaic_0001>
module attributes {stable_mosaic.version = 11 : i64} {
  func.func @kernel(%arg0: i32, %arg1: memref<1x128xf32, #tpu.memory_space<vmem>>, %arg2: memref<1x128xi32, #tpu.memory_space<vmem>>, %arg3: memref<1x128xf32, #tpu.memory_space<vmem>>, %arg4: memref<1x8x128xf32, #tpu.memory_space<vmem>>) attributes {dimension_semantics = [#tpu.dimension_semantics<parallel>], iteration_bounds = array<i64: 1>, scalar_prefetch = 0 : i64, scratch_operands = 0 : i64, tpu.core_type = #tpu.core_type<tc>, window_params = [{transform_indices = @transform_0, window_bounds = array<i64: 1, 128>}, {transform_indices = @transform_1, window_bounds = array<i64: 1, 128>}, {transform_indices = @transform_2, window_bounds = array<i64: 1, 128>}, {transform_indices = @transform_3, window_bounds = array<i64: 1, 8, 128>}]} {
    %c0 = arith.constant 0 : index
    %c0_0 = arith.constant 0 : index
    %0 = vector.load %arg1[%c0, %c0_0] : memref<1x128xf32, #tpu.memory_space<vmem>>, vector<1x128xf32>
    %c0_1 = arith.constant 0 : index
    %c0_2 = arith.constant 0 : index
    %1 = vector.load %arg3[%c0_1, %c0_2] : memref<1x128xf32, #tpu.memory_space<vmem>>, vector<1x128xf32>
    %c0_3 = arith.constant 0 : index
    %c0_4 = arith.constant 0 : index
    %2 = vector.load %arg2[%c0_3, %c0_4] : memref<1x128xi32, #tpu.memory_space<vmem>>, vector<1x128xi32>
    %3 = arith.sitofp %2 : vector<1x128xi32> to vector<1x128xf32>
    %cst = arith.constant 0.000000e+00 : f32
    %4 = vector.broadcast %cst : f32 to vector<1x128xf32>
    %5 = arith.cmpf ogt, %3, %4 : vector<1x128xf32>
    %6 = arith.extui %5 : vector<1x128xi1> to vector<1x128xi32>
    %7 = arith.sitofp %6 : vector<1x128xi32> to vector<1x128xf32>
    %c1_i32 = arith.constant 1 : i32
    %8 = tpu.dynamic_rotate %7 by %c1_i32 dim 1 : vector<1x128xf32>, i32 -> vector<1x128xf32>
    %9 = tpu.iota {dimensions = array<i32: 1>} : vector<1x128xi32>
    %c1_i32_5 = arith.constant 1 : i32
    %10 = arith.muli %c1_i32_5, %arg0 : i32
    %11 = tpu.iota {dimensions = array<i32: 0>} : vector<1x128xi32>
    %12 = vector.broadcast %10 : i32 to vector<1x128xi32>
    %13 = arith.addi %12, %11 : vector<1x128xi32>
    %c8_i32 = arith.constant 8 : i32
    %c0_i32 = arith.constant 0 : i32
    %14 = arith.cmpi eq, %c8_i32, %c0_i32 : i32
    %c1_i32_6 = arith.constant 1 : i32
    %15 = arith.select %14, %c1_i32_6, %c8_i32 : i32
    %16 = vector.broadcast %15 : i32 to vector<1x128xi32>
    %17 = arith.remsi %9, %16 : vector<1x128xi32>
    %c0_i32_7 = arith.constant 0 : i32
    %18 = vector.broadcast %c0_i32_7 : i32 to vector<1x128xi32>
    %19 = arith.cmpi ne, %17, %18 : vector<1x128xi32>
    %c0_i32_8 = arith.constant 0 : i32
    %20 = vector.broadcast %c0_i32_8 : i32 to vector<1x128xi32>
    %21 = arith.cmpi slt, %17, %20 : vector<1x128xi32>
    %c0_i32_9 = arith.constant 0 : i32
    %22 = arith.cmpi slt, %15, %c0_i32_9 : i32
    %23 = vector.broadcast %22 : i1 to vector<1x128xi1>
    %24 = vector.broadcast %23 : vector<1x128xi1> to vector<1x128xi1>
    %25 = arith.xori %21, %24 : vector<1x128xi1>
    %26 = arith.andi %25, %19 : vector<1x128xi1>
    %27 = vector.broadcast %15 : i32 to vector<1x128xi32>
    %28 = arith.addi %17, %27 : vector<1x128xi32>
    %29 = arith.select %26, %28, %17 : vector<1x128xi1>, vector<1x128xi32>
    %c0_i32_10 = arith.constant 0 : i32
    %30 = vector.broadcast %c0_i32_10 : i32 to vector<1x128xi32>
    %31 = arith.cmpi eq, %29, %30 : vector<1x128xi32>
    %cst_11 = arith.constant 1.000000e+00 : f32
    %32 = vector.broadcast %cst_11 : f32 to vector<1x128xf32>
    %33 = arith.select %31, %32, %8 : vector<1x128xi1>, vector<1x128xf32>
    %c1_i32_12 = arith.constant 1 : i32
    %34 = vector.broadcast %c1_i32_12 : i32 to vector<1x128xi32>
    %35 = arith.cmpi slt, %13, %34 : vector<1x128xi32>
    %c16_i32 = arith.constant 16 : i32
    %36 = vector.broadcast %c16_i32 : i32 to vector<1x128xi32>
    %37 = arith.cmpi slt, %9, %36 : vector<1x128xi32>
    %38 = arith.andi %35, %37 : vector<1x128xi1>
    %cst_13 = arith.constant 0.000000e+00 : f32
    %39 = vector.broadcast %cst_13 : f32 to vector<1x128xf32>
    %40 = arith.select %38, %33, %39 : vector<1x128xi1>, vector<1x128xf32>
    %cst_14 = arith.constant 0.000000e+00 : f32
    %41 = vector.broadcast %cst_14 : f32 to vector<1x128xf32>
    %42 = arith.subf %41, %0 : vector<1x128xf32>
    %43 = arith.mulf %42, %1 : vector<1x128xf32>
    %44 = arith.mulf %43, %40 : vector<1x128xf32>
    %cst_15 = arith.constant 0.000000e+00 : f32
    %45 = vector.broadcast %cst_15 : f32 to vector<1x128xf32>
    %46 = arith.select %38, %44, %45 : vector<1x128xi1>, vector<1x128xf32>
    %47 = vector.shape_cast %46 : vector<1x128xf32> to vector<1x1x128xf32>
    %cst_16 = arith.constant dense<0.000000e+00> : vector<1xf32>
    %48 = vector.multi_reduction <add>, %47, %cst_16 [1, 2] : vector<1x1x128xf32> to vector<1xf32>
    %49 = vector.shape_cast %48 : vector<1xf32> to vector<1x1x1xf32>
    %50 = vector.extract %49[0, 0, 0] : f32 from vector<1x1x1xf32>
    %51 = vector.shape_cast %40 : vector<1x128xf32> to vector<1x1x128xf32>
    %cst_17 = arith.constant dense<0.000000e+00> : vector<1xf32>
    %52 = vector.multi_reduction <add>, %51, %cst_17 [1, 2] : vector<1x1x128xf32> to vector<1xf32>
    %53 = vector.shape_cast %52 : vector<1xf32> to vector<1x1x1xf32>
    %54 = vector.extract %53[0, 0, 0] : f32 from vector<1x1x1xf32>
    %55 = tpu.iota {dimensions = array<i32: 1>} : vector<8x128xi32>
    %c0_i32_18 = arith.constant 0 : i32
    %56 = vector.broadcast %c0_i32_18 : i32 to vector<8x128xi32>
    %57 = arith.cmpi eq, %55, %56 : vector<8x128xi32>
    %58 = vector.broadcast %50 : f32 to vector<8x128xf32>
    %59 = vector.broadcast %54 : f32 to vector<8x128xf32>
    %60 = arith.select %57, %58, %59 : vector<8x128xi1>, vector<8x128xf32>
    %c0_19 = arith.constant 0 : index
    %c0_20 = arith.constant 0 : index
    %c0_21 = arith.constant 0 : index
    %61 = vector.load %arg4[%c0_19, %c0_20, %c0_21] : memref<1x8x128xf32, #tpu.memory_space<vmem>>, vector<1x8x128xf32>
    %62 = vector.shape_cast %61 : vector<1x8x128xf32> to vector<8x128xf32>
    %63 = vector.shape_cast %60 : vector<8x128xf32> to vector<1x8x128xf32>
    tpu.vector_store %arg4[%c0_19, %c0_20, %c0_21], %63 {strides = array<i32>} : memref<1x8x128xf32, #tpu.memory_space<vmem>>, vector<1x8x128xf32>,
    return
  }
  func.func @transform_0(%arg0: i32) -> (i32, i32) {
    %c0_i32 = arith.constant 0 : i32
    %c0_i32_0 = arith.constant 0 : i32
    return %arg0, %c0_i32 : i32, i32
  }
  func.func @transform_1(%arg0: i32) -> (i32, i32) {
    %c0_i32 = arith.constant 0 : i32
    %c0_i32_0 = arith.constant 0 : i32
    return %arg0, %c0_i32 : i32, i32
  }
  func.func @transform_2(%arg0: i32) -> (i32, i32) {
    %c0_i32 = arith.constant 0 : i32
    %c0_i32_0 = arith.constant 0 : i32
    return %arg0, %c0_i32 : i32, i32
  }
  func.func @transform_3(%arg0: i32) -> (i32, i32, i32) {
    %c0_i32 = arith.constant 0 : i32
    %c0_i32_0 = arith.constant 0 : i32
    %c0_i32_1 = arith.constant 0 : i32
    return %arg0, %c0_i32, %c0_i32_0 : i32, i32, i32
  }
}

</mosaic_0001>

<llo_original>
// kernel: tpu_custom_call.1
$region0: #{tpu_custom_call.1}
  #allocation0 [shape = 'u32[]', space=smem, size = 0x4, offset = 0x4, fixed_abs, tag = 'smem constant byte address 0x4 - core index']
  #allocation1 [shape = 'u32[144,128]{1,0:T(1,128)}', space=vmem, size = 0x12000, scoped, tag = 'internal scratch']
  %s0 = inlined_call_operand.hbm [shape: f32[1,128], index: 0, kind: input, shape index: {}]
  %s1 = inlined_call_operand.vmem [shape: s32[1,128], index: 1, kind: input, shape index: {}]
  %s2 = inlined_call_operand.vmem [shape: f32[1,128], index: 2, kind: input, shape index: {}]
  %s3 = inlined_call_operand.hbm [shape: f32[1,8,128], index: 3, kind: output, shape index: {}]
  %s4 = sld [smem:[#allocation0]]
  $region26: #{tpu_custom_call.1} parent=0
    _
  %s6 = ssub.s32 1, %s4
  %s7 = scalar_select 0, %s6, %s4
  $region1: #{tpu_custom_call.1} parent=0
    #allocation2 [shape = 'u8[512]{0}', space=vmem, size = 0x400, scoped, tag = 'input window, operand 0, single buffered']
    #allocation3 [shape = 's32[1]{0}', space=sflag, size = 0x4, scoped, tag = 'scoped memory for tpu_custom_call.1']
    #allocation4 [shape = 's32[1]{0}', space=sflag, size = 0x4, scoped, tag = 'scoped memory for tpu_custom_call.1']
    #allocation5 [shape = 'u8[4096]{0}', space=vmem, size = 0x1000, scoped, tag = 'output window, operand 0, single buffered']
    %8 = vsyncpa [#allocation3], 0
    %9 = vsyncpa [#allocation4], 0
    // Predicated region
    $region2: #{tpu_custom_call.1} parent=1 // pred_check
      _
    $region3: #{tpu_custom_call.1} parent=1 // pred_check_branch
      %11 = sbr.rel (0) target = $region5
    $region4: #{tpu_custom_call.1} parent=1 // pred_region
      %s13 = ssub.s32 16, 16
      %14 = vsyncadd [#allocation3], %s13
      %s16 = sshll.u32 [#allocation2], 4
      %s17 = int_to_ptr.vmem [resolvable:$true] %s16
      %19 = dma.hbm_to_vmem [thread:$0]  %s0, 16, %s17, [#allocation3]
    $region5: #{tpu_custom_call.1} parent=1 // pred_fallthru
      _
    // Predicated region
    $region6: #{tpu_custom_call.1} parent=1 // pred_check
      _
    $region7: #{tpu_custom_call.1} parent=1 // pred_check_branch
      %21 = sbr.rel (0) target = $region9
    $region8: #{tpu_custom_call.1} parent=1 // pred_region
      _
    $region9: #{tpu_custom_call.1} parent=1 // pred_fallthru
      _
    // Predicated region
    $region10: #{tpu_custom_call.1} parent=1 // pred_check
      _
    $region11: #{tpu_custom_call.1} parent=1 // pred_check_branch
      %23 = sbr.rel (0) target = $region13
    $region12: #{tpu_custom_call.1} parent=1 // pred_region
      _
    $region13: #{tpu_custom_call.1} parent=1 // pred_fallthru
      _
    // Predicated region
    $region14: #{tpu_custom_call.1} parent=1 // pred_check
      _
    $region15: #{tpu_custom_call.1} parent=1 // pred_check_branch
      %25 = sbr.rel (0) target = $region17
    $region16: #{tpu_custom_call.1} parent=1 // pred_region
      %26 = dma.done [#allocation3], 16
    $region17: #{tpu_custom_call.1} parent=1 // pred_fallthru
      _
    %v27 = vld [vmem:[#allocation2] sm:$0x1]
    %v28 = vld [vmem:[%s2] sm:$0x1]
    %v29 = vld [vmem:[%s1] sm:$0x1]
    %v30 = vcvt.s32.f32 %v29
    %vm31 = vcmp.gt.f32.partialorder %v30, 0.0
    %v32 = vsel %vm31, 1, 0
    %v33 = vcvt.s32.f32 %v32
    %34 = vrot.lane.b32.xlu0 %v33, 1
    %v35 = vpop.permute.xlu0 %34
    %v36 = vlaneseq
    %v37 = vand.u32 %v36, 127
    %v38 = vlaneseq
    %v39 = vshrl.u32 %v38, 7
    %v40 = vstv 0
    %v41 = vadd.s32 %v40, %v39
    %vm42 = vcmp.lt.s32.totalorder %v37, 0
    %v43 = vsub.s32 0, %v37
    %v44 = vsel %vm42, %v43, %v37
    %v45 = vshrl.u32 %v44, 3
    %v46 = vand.u32 %v44, 7
    %v47 = vsub.s32 0, %v46
    %v48 = vsel %vm42, %v47, %v46
    %vm49 = vcmp.ne.s32.totalorder %v48, 0
    %vm50 = vcmp.lt.s32.totalorder %v48, 0
    %vm51 = vmand %vm50, %vm49
    %v52 = vadd.s32 %v48, 8
    %v53 = vsel %vm51, %v52, %v48
    %vm54 = vcmp.eq.s32.totalorder %v53, 0
    %v55 = vsel %vm54, 1.0, %v35
    %vm56 = vcmp.lt.s32.totalorder %v41, 1
    %vm57 = vcmp.lt.s32.totalorder %v37, 16
    %vm58 = vmand %vm56, %vm57
    %v59 = vsel %vm58, %v55, 0.0
    %v60 = vsub.f32 0.0, %v27
    %v61 = vmul.f32 %v60, %v28
    %v62 = vmul.f32 %v61, %v59
    %v63 = vsel %vm58, %v62, 0.0
    %vm64 = vcmask 1040384
    %v65 = vsel %vm64, %v63, 0.0
    %66 = vadd.xlane.f32.xlu0 %v65
    %v67 = vpop.xlane.xlu0 %66
    %v68 = vrot.slane %v67, 4
    %v69 = vadd.f32 %v67, %v68
    %v70 = vrot.slane %v69, 2
    %v71 = vadd.f32 %v69, %v70
    %v72 = vrot.slane %v71, 1
    %v73 = vadd.f32 %v71, %v72
    %s74 = vtos %v73
    %v75 = vsel %vm64, %v59, 0.0
    %76 = vadd.xlane.f32.xlu0 %v75
    %v77 = vpop.xlane.xlu0 %76
    %v78 = vrot.slane %v77, 4
    %v79 = vadd.f32 %v77, %v78
    %v80 = vrot.slane %v79, 2
    %v81 = vadd.f32 %v79, %v80
    %v82 = vrot.slane %v81, 1
    %v83 = vadd.f32 %v81, %v82
    %s84 = vtos %v83
    %vm85 = vcmp.eq.s32.totalorder %v37, 0
    %v86 = vstv %s74
    %v87 = vstv %s84
    %v88 = vsel %vm85, %v86, %v87
    %89 = vst [vmem:[#allocation5] sm:$0xff] %v88
    // Predicated region
    $region18: #{tpu_custom_call.1} parent=1 // pred_check
      _
    $region19: #{tpu_custom_call.1} parent=1 // pred_check_branch
      %91 = sbr.rel (0) target = $region21
    $region20: #{tpu_custom_call.1} parent=1 // pred_region
      %s93 = ssub.s32 128, 128
      %94 = vsyncadd [#allocation4], %s93
      %s96 = sshll.u32 [#allocation5], 4
      %s97 = int_to_ptr.vmem [resolvable:$true] %s96
      %99 = dma.vmem_to_hbm [thread:$0]  %s97, 128, %s3, [#allocation4]
    $region21: #{tpu_custom_call.1} parent=1 // pred_fallthru
      _
    // Predicated region
    $region22: #{tpu_custom_call.1} parent=1 // pred_check
      _
    $region23: #{tpu_custom_call.1} parent=1 // pred_check_branch
      %101 = sbr.rel (0) target = $region25
    $region24: #{tpu_custom_call.1} parent=1 // pred_region
      %102 = dma.done [#allocation4], 128
    $region25: #{tpu_custom_call.1} parent=1 // pred_fallthru
      _
    %103 = vsyncpa [#allocation3], 1
    %104 = vsyncpa [#allocation4], 1

</llo_original>
